<compile_context>
chip_gen: v7x
topology: tpu7x:2x2x1
jax: 0.10.0
libtpu: 0.0.40
codegen_flags: <defaults>
</compile_context>

<pallas_src>
import math

import jax
import jax.numpy as jnp
from jax.experimental import pallas as pl
from jax.experimental.pallas import tpu as pltpu

LN_EPS = 1e-5  # torch.nn.LayerNorm default eps


def _output_mlp_kernel(x_ref, gvec_ref, gmat_ref, csum_ref, rmat_ref,
                       smat_ref, w2b_ref, out_ref):
    x = x_ref[...].astype(jnp.float32)                       # (Bt, T*C)

    # MXU push first: the gate-logit matmul does not depend on the LN
    # statistics (LN affine, gate weight and 1/tau are folded into gmat).
    raw = jnp.dot(x, gmat_ref[...],
                  preferred_element_type=jnp.float32)        # (Bt, T)

    # Joint LayerNorm([T, C]) statistics over the flattened row (VPU/XLU,
    # overlaps with the matmul above).
    mu = jnp.mean(x, axis=-1, keepdims=True)
    var = jnp.mean((x - mu) ** 2, axis=-1, keepdims=True)
    rs = jax.lax.rsqrt(var + LN_EPS)                         # (Bt, 1)

    # Gumbel-softmax over tokens. gvec already carries gumbel/tau plus the
    # folded LN-bias/gate-bias terms; csum is the per-token mean correction.
    y = rs * raw - (rs * mu) * csum_ref[...] + gvec_ref[...].astype(jnp.float32)
    y = y - jnp.max(y, axis=-1, keepdims=True)
    e = jnp.exp(y)
    gate = e * pl.reciprocal(jnp.sum(e, axis=-1, keepdims=True), approx=True)

    # pooled[b, c] = mean_t gate[b, t] * x[b, t, c]  (1/T folded into smat):
    #   gate_rep = gate @ kron(I_T, 1_C); pooled = (gate_rep * x) @ smat.
    gate_rep = jnp.dot(gate, rmat_ref[...],
                       preferred_element_type=jnp.float32)   # (Bt, T*C)
    pooled = jnp.dot(gate_rep * x, smat_ref[...],
                     preferred_element_type=jnp.float32)     # (Bt, C)

    # LayerNorm(C); its affine and the output Linear are folded into w2b,
    # whose columns are zero-padded to 128 lanes for an unmasked store.
    mu2 = jnp.mean(pooled, axis=-1, keepdims=True)
    var2 = jnp.mean((pooled - mu2) ** 2, axis=-1, keepdims=True)
    h = (pooled - mu2) * jax.lax.rsqrt(var2 + LN_EPS)        # (Bt, C)

    n_c = pooled.shape[-1]
    out = (jnp.dot(h, w2b_ref[0:n_c, :],
                   preferred_element_type=jnp.float32)
           + w2b_ref[n_c:n_c + 1, :])                        # (Bt, n_out_pad)
    out_ref[...] = out.astype(out_ref.dtype)


def output_mlp_forward(x, params, gumbel, *, tau=1e-4, block_b=None):
    """x: (B, T, C) activations, gumbel: (B, T) Gumbel(0,1) noise."""
    B, T, C = x.shape
    n_out = params["out_w"].shape[0]
    f32 = jnp.float32
    inv_tau = 1.0 / float(tau)

    # ---- host-side packing / algebraic folds -------------------------------
    lnw = params["ln_w"].reshape(T, C).astype(f32)
    lnb = params["ln_b"].reshape(T, C).astype(f32)
    gw = params["gate_w"].reshape(C).astype(f32)
    gb = params["gate_b"].astype(f32).reshape(())

    # gmat[t*C+c, t] = ln_w[t,c] * gate_w[c] / tau   (selector matmul, no z)
    scaled = lnw * gw[None, :] * inv_tau                                   # (T, C)
    gmat = (jnp.kron(jnp.eye(T, dtype=f32), jnp.ones((C, 1), f32))
            * scaled.reshape(T * C, 1))                                    # (T*C, T)
    csum = scaled.sum(axis=1).reshape(1, T)                                # (1, T)
    bias_t = ((lnb * gw[None, :]).sum(axis=1) + gb) * inv_tau              # (T,)
    gvec = gumbel.astype(f32) * inv_tau + bias_t[None, :]                  # (B, T)

    rmat = jnp.kron(jnp.eye(T, dtype=f32), jnp.ones((1, C), f32))          # (T, T*C)
    smat = jnp.kron(jnp.ones((T, 1), f32), jnp.eye(C, dtype=f32)) / T      # (T*C, C)

    # LN(C) affine + output Linear folded together; pad n_out to 128 lanes so
    # the final matmul directly yields a lane-dense output tile.
    n_out_pad = max(128, ((n_out + 127) // 128) * 128)
    w2 = params["ln2_w"].astype(f32)[:, None] * params["out_w"].astype(f32).T
    b2 = params["ln2_b"].astype(f32) @ params["out_w"].astype(f32).T \
        + params["out_b"].astype(f32)
    w2b = jnp.zeros((C + 1, n_out_pad), f32)
    w2b = w2b.at[:C, :n_out].set(w2).at[C, :n_out].set(b2)                 # (C+1, 128)

    x2 = x.reshape(B, T * C)

    # ---- batch tiling: one grid step until per-step compute is ~1 us -------
    if block_b is None:
        block_b = min(B, 256)
    block_b = max(1, min(block_b, B))
    block_b = ((block_b + 7) // 8) * 8          # sublane-aligned batch tiles
    n_blocks = pl.cdiv(B, block_b)
    b_pad = n_blocks * block_b
    if b_pad != B:
        x2 = jnp.pad(x2, ((0, b_pad - B), (0, 0)))
        gvec = jnp.pad(gvec, ((0, b_pad - B), (0, 0)))

    def _full(arr):
        nd = arr.ndim
        return pl.BlockSpec(arr.shape, lambda i, _nd=nd: (0,) * _nd)

    out = pl.pallas_call(
        _output_mlp_kernel,
        out_shape=jax.ShapeDtypeStruct((b_pad, n_out_pad), x.dtype),
        grid=(n_blocks,),
        in_specs=[
            pl.BlockSpec((block_b, T * C), lambda i: (i, 0)),
            pl.BlockSpec((block_b, T), lambda i: (i, 0)),
            _full(gmat), _full(csum), _full(rmat), _full(smat), _full(w2b),
        ],
        out_specs=pl.BlockSpec((block_b, n_out_pad), lambda i: (i, 0)),
        compiler_params=pltpu.CompilerParams(
            dimension_semantics=("parallel",)),
    )(x2, gvec, gmat, csum, rmat, smat, w2b)
    return out[:B, :n_out]


def reference(x, params, gumbel, *, tau=1e-4):
    """Pure-JAX mirror of the PyTorch eval-mode forward."""
    B, T, C = x.shape
    xf = x.reshape(B, -1)
    mu = xf.mean(-1)[:, None, None]
    var = ((x - mu) ** 2).reshape(B, -1).mean(-1)[:, None, None]
    z = (x - mu) / jnp.sqrt(var + LN_EPS) * params["ln_w"] + params["ln_b"]
    logits = z @ params["gate_w"].reshape(C, 1) + params["gate_b"]       # (B, T, 1)
    gate = jax.nn.softmax((logits + gumbel[..., None]) / tau, axis=1)    # (B, T, 1)
    pooled = (gate * x).mean(axis=1)                                     # (B, C)
    mu2 = pooled.mean(-1, keepdims=True)
    var2 = ((pooled - mu2) ** 2).mean(-1, keepdims=True)
    h = (pooled - mu2) / jnp.sqrt(var2 + LN_EPS) * params["ln2_w"] + params["ln2_b"]
    return h @ params["out_w"].T + params["out_b"]


if __name__ == "__main__":
    B, T, C, N_OUT = 16, 16, 8, 8   # batch, n_tokens, n_channel, n_output (T*C = 128)
    key = jax.random.PRNGKey(0)
    ks = jax.random.split(key, 10)

    x = jax.random.normal(ks[0], (B, T, C), jnp.float32)
    params = {
        "ln_w": 1.0 + 0.1 * jax.random.normal(ks[1], (T, C), jnp.float32),
        "ln_b": 0.1 * jax.random.normal(ks[2], (T, C), jnp.float32),
        "gate_w": jax.random.normal(ks[3], (1, C), jnp.float32) / math.sqrt(C),
        "gate_b": 0.1 * jax.random.normal(ks[4], (1,), jnp.float32),
        "ln2_w": 1.0 + 0.1 * jax.random.normal(ks[5], (C,), jnp.float32),
        "ln2_b": 0.1 * jax.random.normal(ks[6], (C,), jnp.float32),
        "out_w": jax.random.normal(ks[7], (N_OUT, C), jnp.float32) / math.sqrt(C),
        "out_b": 0.1 * jax.random.normal(ks[8], (N_OUT,), jnp.float32),
    }
    gumbel = jax.random.gumbel(ks[9], (B, T), jnp.float32)

    out = output_mlp_forward(x, params, gumbel, tau=1e-4)
    out = jax.block_until_ready(out)

    ref = reference(x, params, gumbel, tau=1e-4)
    err = float(jnp.max(jnp.abs(out - ref)))
    assert jnp.allclose(out, ref, rtol=1e-4, atol=1e-4), f"max abs err {err}"
    print("KERNEL_OK")
</pallas_src>

<mosaic_0001>
module attributes {stable_mosaic.version = 11 : i64} {
  func.func @_output_mlp_kernel(%arg0: i32, %arg1: memref<16x128xf32, #tpu.memory_space<vmem>>, %arg2: memref<16x16xf32, #tpu.memory_space<vmem>>, %arg3: memref<128x16xf32, #tpu.memory_space<vmem>>, %arg4: memref<1x16xf32, #tpu.memory_space<vmem>>, %arg5: memref<16x128xf32, #tpu.memory_space<vmem>>, %arg6: memref<128x8xf32, #tpu.memory_space<vmem>>, %arg7: memref<9x128xf32, #tpu.memory_space<vmem>>, %arg8: memref<16x128xf32, #tpu.memory_space<vmem>>) attributes {dimension_semantics = [#tpu.dimension_semantics<parallel>], iteration_bounds = array<i64: 1>, scalar_prefetch = 0 : i64, scratch_operands = 0 : i64, tpu.core_type = #tpu.core_type<tc>, window_params = [{transform_indices = @transform_0, window_bounds = array<i64: 16, 128>}, {transform_indices = @transform_1, window_bounds = array<i64: 16, 16>}, {pipeline_mode = #tpu.pipeline_mode<synchronous>, transform_indices = @transform_2, window_bounds = array<i64: 128, 16>}, {pipeline_mode = #tpu.pipeline_mode<synchronous>, transform_indices = @transform_3, window_bounds = array<i64: 1, 16>}, {pipeline_mode = #tpu.pipeline_mode<synchronous>, transform_indices = @transform_4, window_bounds = array<i64: 16, 128>}, {pipeline_mode = #tpu.pipeline_mode<synchronous>, transform_indices = @transform_5, window_bounds = array<i64: 128, 8>}, {pipeline_mode = #tpu.pipeline_mode<synchronous>, transform_indices = @transform_6, window_bounds = array<i64: 9, 128>}, {transform_indices = @transform_7, window_bounds = array<i64: 16, 128>}]} {
    %c0 = arith.constant 0 : index
    %c0_0 = arith.constant 0 : index
    %0 = vector.load %arg1[%c0, %c0_0] : memref<16x128xf32, #tpu.memory_space<vmem>>, vector<16x128xf32>
    %c0_1 = arith.constant 0 : index
    %c0_2 = arith.constant 0 : index
    %1 = vector.load %arg3[%c0_1, %c0_2] : memref<128x16xf32, #tpu.memory_space<vmem>>, vector<128x16xf32>
    %cst = arith.constant dense<0.000000e+00> : vector<16x16xf32>
    %2 = tpu.matmul %0, %1, %cst {dimension_numbers = #tpu.dot_dimension_numbers<[1], [0], [0], [1], [0, 0, 1, 1], [], []>} : vector<16x128xf32>, vector<128x16xf32>, vector<16x16xf32> -> vector<16x16xf32>
    %cst_3 = arith.constant dense<0.000000e+00> : vector<16xf32>
    %3 = vector.multi_reduction <add>, %0, %cst_3 [1] : vector<16x128xf32> to vector<16xf32>
    %4 = vector.shape_cast %3 : vector<16xf32> to vector<16x1xf32>
    %cst_4 = arith.constant 1.280000e+02 : f32
    %5 = vector.broadcast %cst_4 : f32 to vector<16x1xf32>
    %6 = arith.divf %4, %5 : vector<16x1xf32>
    %7 = vector.broadcast %6 : vector<16x1xf32> to vector<16x128xf32>
    %8 = arith.subf %0, %7 : vector<16x128xf32>
    %9 = arith.mulf %8, %8 : vector<16x128xf32>
    %cst_5 = arith.constant dense<0.000000e+00> : vector<16xf32>
    %10 = vector.multi_reduction <add>, %9, %cst_5 [1] : vector<16x128xf32> to vector<16xf32>
    %11 = vector.shape_cast %10 : vector<16xf32> to vector<16x1xf32>
    %cst_6 = arith.constant 1.280000e+02 : f32
    %12 = vector.broadcast %cst_6 : f32 to vector<16x1xf32>
    %13 = arith.divf %11, %12 : vector<16x1xf32>
    %cst_7 = arith.constant 9.99999974E-6 : f32
    %14 = vector.broadcast %cst_7 : f32 to vector<16x1xf32>
    %15 = arith.addf %13, %14 : vector<16x1xf32>
    %16 = math.rsqrt %15 : vector<16x1xf32>
    %17 = vector.broadcast %16 : vector<16x1xf32> to vector<16x16xf32>
    %18 = arith.mulf %17, %2 : vector<16x16xf32>
    %19 = arith.mulf %16, %6 : vector<16x1xf32>
    %c0_8 = arith.constant 0 : index
    %c0_9 = arith.constant 0 : index
    %20 = vector.load %arg4[%c0_8, %c0_9] : memref<1x16xf32, #tpu.memory_space<vmem>>, vector<1x16xf32>
    %21 = vector.broadcast %19 : vector<16x1xf32> to vector<16x16xf32>
    %22 = vector.broadcast %20 : vector<1x16xf32> to vector<16x16xf32>
    %23 = arith.mulf %21, %22 : vector<16x16xf32>
    %24 = arith.subf %18, %23 : vector<16x16xf32>
    %c0_10 = arith.constant 0 : index
    %c0_11 = arith.constant 0 : index
    %25 = vector.load %arg2[%c0_10, %c0_11] : memref<16x16xf32, #tpu.memory_space<vmem>>, vector<16x16xf32>
    %26 = arith.addf %24, %25 : vector<16x16xf32>
    %cst_12 = arith.constant dense<0xFF800000> : vector<16xf32>
    %27 = vector.multi_reduction <maximumf>, %26, %cst_12 [1] : vector<16x16xf32> to vector<16xf32>
    %28 = vector.shape_cast %27 : vector<16xf32> to vector<16x1xf32>
    %29 = vector.broadcast %28 : vector<16x1xf32> to vector<16x16xf32>
    %30 = arith.subf %26, %29 : vector<16x16xf32>
    %31 = math.exp %30 : vector<16x16xf32>
    %cst_13 = arith.constant dense<0.000000e+00> : vector<16xf32>
    %32 = vector.multi_reduction <add>, %31, %cst_13 [1] : vector<16x16xf32> to vector<16xf32>
    %33 = vector.shape_cast %32 : vector<16xf32> to vector<16x1xf32>
    %34 = tpu.reciprocal %33 {approx = true} : vector<16x1xf32> -> vector<16x1xf32>
    %35 = vector.broadcast %34 : vector<16x1xf32> to vector<16x16xf32>
    %36 = arith.mulf %31, %35 : vector<16x16xf32>
    %c0_14 = arith.constant 0 : index
    %c0_15 = arith.constant 0 : index
    %37 = vector.load %arg5[%c0_14, %c0_15] : memref<16x128xf32, #tpu.memory_space<vmem>>, vector<16x128xf32>
    %cst_16 = arith.constant dense<0.000000e+00> : vector<16x128xf32>
    %38 = tpu.matmul %36, %37, %cst_16 {dimension_numbers = #tpu.dot_dimension_numbers<[1], [0], [0], [1], [0, 0, 1, 1], [], []>} : vector<16x16xf32>, vector<16x128xf32>, vector<16x128xf32> -> vector<16x128xf32>
    %39 = arith.mulf %38, %0 : vector<16x128xf32>
    %c0_17 = arith.constant 0 : index
    %c0_18 = arith.constant 0 : index
    %40 = vector.load %arg6[%c0_17, %c0_18] : memref<128x8xf32, #tpu.memory_space<vmem>>, vector<128x8xf32>
    %cst_19 = arith.constant dense<0.000000e+00> : vector<16x8xf32>
    %41 = tpu.matmul %39, %40, %cst_19 {dimension_numbers = #tpu.dot_dimension_numbers<[1], [0], [0], [1], [0, 0, 1, 1], [], []>} : vector<16x128xf32>, vector<128x8xf32>, vector<16x8xf32> -> vector<16x8xf32>
    %cst_20 = arith.constant dense<0.000000e+00> : vector<16xf32>
    %42 = vector.multi_reduction <add>, %41, %cst_20 [1] : vector<16x8xf32> to vector<16xf32>
    %43 = vector.shape_cast %42 : vector<16xf32> to vector<16x1xf32>
    %cst_21 = arith.constant 8.000000e+00 : f32
    %44 = vector.broadcast %cst_21 : f32 to vector<16x1xf32>
    %45 = arith.divf %43, %44 : vector<16x1xf32>
    %46 = vector.broadcast %45 : vector<16x1xf32> to vector<16x8xf32>
    %47 = arith.subf %41, %46 : vector<16x8xf32>
    %48 = arith.mulf %47, %47 : vector<16x8xf32>
    %cst_22 = arith.constant dense<0.000000e+00> : vector<16xf32>
    %49 = vector.multi_reduction <add>, %48, %cst_22 [1] : vector<16x8xf32> to vector<16xf32>
    %50 = vector.shape_cast %49 : vector<16xf32> to vector<16x1xf32>
    %cst_23 = arith.constant 8.000000e+00 : f32
    %51 = vector.broadcast %cst_23 : f32 to vector<16x1xf32>
    %52 = arith.divf %50, %51 : vector<16x1xf32>
    %53 = vector.broadcast %45 : vector<16x1xf32> to vector<16x8xf32>
    %54 = arith.subf %41, %53 : vector<16x8xf32>
    %cst_24 = arith.constant 9.99999974E-6 : f32
    %55 = vector.broadcast %cst_24 : f32 to vector<16x1xf32>
    %56 = arith.addf %52, %55 : vector<16x1xf32>
    %57 = math.rsqrt %56 : vector<16x1xf32>
    %58 = vector.broadcast %57 : vector<16x1xf32> to vector<16x8xf32>
    %59 = arith.mulf %54, %58 : vector<16x8xf32>
    %c0_25 = arith.constant 0 : index
    %c0_26 = arith.constant 0 : index
    %60 = vector.load %arg7[%c0_25, %c0_26] : memref<9x128xf32, #tpu.memory_space<vmem>>, vector<8x128xf32>
    %cst_27 = arith.constant dense<0.000000e+00> : vector<16x128xf32>
    %61 = tpu.matmul %59, %60, %cst_27 {dimension_numbers = #tpu.dot_dimension_numbers<[1], [0], [0], [1], [0, 0, 1, 1], [], []>} : vector<16x8xf32>, vector<8x128xf32>, vector<16x128xf32> -> vector<16x128xf32>
    %c8 = arith.constant 8 : index
    %c0_28 = arith.constant 0 : index
    %62 = vector.load %arg7[%c8, %c0_28] : memref<9x128xf32, #tpu.memory_space<vmem>>, vector<1x128xf32>
    %63 = vector.broadcast %62 : vector<1x128xf32> to vector<16x128xf32>
    %64 = arith.addf %61, %63 : vector<16x128xf32>
    %c0_29 = arith.constant 0 : index
    %c0_30 = arith.constant 0 : index
    %65 = vector.load %arg8[%c0_29, %c0_30] : memref<16x128xf32, #tpu.memory_space<vmem>>, vector<16x128xf32>
    tpu.vector_store %arg8[%c0_29, %c0_30], %64 {strides = array<i32>} : memref<16x128xf32, #tpu.memory_space<vmem>>, vector<16x128xf32>,
    return
  }
  func.func @transform_0(%arg0: i32) -> (i32, i32) {
    %c0_i32 = arith.constant 0 : i32
    %c0_i32_0 = arith.constant 0 : i32
    return %arg0, %c0_i32 : i32, i32
  }
  func.func @transform_1(%arg0: i32) -> (i32, i32) {
    %c0_i32 = arith.constant 0 : i32
    %c0_i32_0 = arith.constant 0 : i32
    return %arg0, %c0_i32 : i32, i32
  }
  func.func @transform_2(%arg0: i32) -> (i32, i32) {
    %c0_i32 = arith.constant 0 : i32
    %c0_i32_0 = arith.constant 0 : i32
    %c0_i32_1 = arith.constant 0 : i32
    return %c0_i32, %c0_i32_0 : i32, i32
  }
  func.func @transform_3(%arg0: i32) -> (i32, i32) {
    %c0_i32 = arith.constant 0 : i32
    %c0_i32_0 = arith.constant 0 : i32
    %c0_i32_1 = arith.constant 0 : i32
    return %c0_i32, %c0_i32_0 : i32, i32
  }
  func.func @transform_4(%arg0: i32) -> (i32, i32) {
    %c0_i32 = arith.constant 0 : i32
    %c0_i32_0 = arith.constant 0 : i32
    %c0_i32_1 = arith.constant 0 : i32
    return %c0_i32, %c0_i32_0 : i32, i32
  }
  func.func @transform_5(%arg0: i32) -> (i32, i32) {
    %c0_i32 = arith.constant 0 : i32
    %c0_i32_0 = arith.constant 0 : i32
    %c0_i32_1 = arith.constant 0 : i32
    return %c0_i32, %c0_i32_0 : i32, i32
  }
  func.func @transform_6(%arg0: i32) -> (i32, i32) {
    %c0_i32 = arith.constant 0 : i32
    %c0_i32_0 = arith.constant 0 : i32
    %c0_i32_1 = arith.constant 0 : i32
    return %c0_i32, %c0_i32_0 : i32, i32
  }
  func.func @transform_7(%arg0: i32) -> (i32, i32) {
    %c0_i32 = arith.constant 0 : i32
    %c0_i32_0 = arith.constant 0 : i32
    return %arg0, %c0_i32 : i32, i32
  }
}

</mosaic_0001>

<llo_original>
// kernel: tpu_custom_call.1
$region0: #{tpu_custom_call.1}
  #allocation0 [shape = 'u32[]', space=smem, size = 0x4, offset = 0x4, fixed_abs, tag = 'smem constant byte address 0x4 - core index']
  #allocation1 [shape = 'u32[144,128]{1,0:T(1,128)}', space=vmem, size = 0x12000, scoped, tag = 'internal scratch']
  %s0 = inlined_call_operand.vmem [shape: f32[16,128], index: 0, kind: input, shape index: {}]
  %s1 = inlined_call_operand.vmem [shape: f32[16,16], index: 1, kind: input, shape index: {}]
  %s2 = inlined_call_operand.vmem [shape: f32[128,16], index: 2, kind: input, shape index: {}]
  %s3 = inlined_call_operand.vmem [shape: f32[1,16], index: 3, kind: input, shape index: {}]
  %s4 = inlined_call_operand.vmem [shape: f32[16,128], index: 4, kind: input, shape index: {}]
  %s5 = inlined_call_operand.vmem [shape: f32[128,8], index: 5, kind: input, shape index: {}]
  %s6 = inlined_call_operand.vmem [shape: f32[9,128], index: 6, kind: input, shape index: {}]
  %s7 = inlined_call_operand.hbm [shape: f32[16,128], index: 7, kind: output, shape index: {}]
  %s8 = sld [smem:[#allocation0]]
  $region38: #{tpu_custom_call.1} parent=0
    _
  %s10 = ssub.s32 1, %s8
  %s11 = scalar_select 0, %s10, %s8
  $region1: #{tpu_custom_call.1} parent=0
    #allocation2 [shape = 'u8[8192]{0}', space=vmem, size = 0x2000, scoped, tag = 'output window, operand 0, single buffered']
    #allocation3 [shape = 's32[1]{0}', space=sflag, size = 0x4, scoped, tag = 'scoped memory for tpu_custom_call.1']
    %12 = vsyncpa [#allocation3], 0
    // Predicated region
    $region2: #{tpu_custom_call.1} parent=1 // pred_check
      _
    $region3: #{tpu_custom_call.1} parent=1 // pred_check_branch
      %14 = sbr.rel (0) target = $region5
    $region4: #{tpu_custom_call.1} parent=1 // pred_region
      _
    $region5: #{tpu_custom_call.1} parent=1 // pred_fallthru
      _
    // Predicated region
    $region6: #{tpu_custom_call.1} parent=1 // pred_check
      _
    $region7: #{tpu_custom_call.1} parent=1 // pred_check_branch
      %16 = sbr.rel (0) target = $region9
    $region8: #{tpu_custom_call.1} parent=1 // pred_region
      _
    $region9: #{tpu_custom_call.1} parent=1 // pred_fallthru
      _
    // Predicated region
    $region10: #{tpu_custom_call.1} parent=1 // pred_check
      _
    $region11: #{tpu_custom_call.1} parent=1 // pred_check_branch
      %18 = sbr.rel (0) target = $region13
    $region12: #{tpu_custom_call.1} parent=1 // pred_region
      _
    $region13: #{tpu_custom_call.1} parent=1 // pred_fallthru
      _
    // Predicated region
    $region14: #{tpu_custom_call.1} parent=1 // pred_check
      _
    $region15: #{tpu_custom_call.1} parent=1 // pred_check_branch
      %20 = sbr.rel (0) target = $region17
    $region16: #{tpu_custom_call.1} parent=1 // pred_region
      _
    $region17: #{tpu_custom_call.1} parent=1 // pred_fallthru
      _
    // Predicated region
    $region18: #{tpu_custom_call.1} parent=1 // pred_check
      _
    $region19: #{tpu_custom_call.1} parent=1 // pred_check_branch
      %22 = sbr.rel (0) target = $region21
    $region20: #{tpu_custom_call.1} parent=1 // pred_region
      _
    $region21: #{tpu_custom_call.1} parent=1 // pred_fallthru
      _
    // Predicated region
    $region22: #{tpu_custom_call.1} parent=1 // pred_check
      _
    $region23: #{tpu_custom_call.1} parent=1 // pred_check_branch
      %24 = sbr.rel (0) target = $region25
    $region24: #{tpu_custom_call.1} parent=1 // pred_region
      _
    $region25: #{tpu_custom_call.1} parent=1 // pred_fallthru
      _
    // Predicated region
    $region26: #{tpu_custom_call.1} parent=1 // pred_check
      _
    $region27: #{tpu_custom_call.1} parent=1 // pred_check_branch
      %26 = sbr.rel (0) target = $region29
    $region28: #{tpu_custom_call.1} parent=1 // pred_region
      _
    $region29: #{tpu_custom_call.1} parent=1 // pred_fallthru
      _
    %v27 = vld [vmem:[%s0] sm:$0xff]
    %v28 = vld [vmem:[%s0 + $0x8] sm:$0xff]
    %v29 = vld [vmem:[%s2] sm:$0xff]
    %v30 = vld [vmem:[%s2 + $0x8] sm:$0xff]
    %v31 = vld [vmem:[%s2 + $0x10] sm:$0xff]
    %v32 = vld [vmem:[%s2 + $0x18] sm:$0xff]
    %v33 = vld [vmem:[%s2 + $0x20] sm:$0xff]
    %v34 = vld [vmem:[%s2 + $0x28] sm:$0xff]
    %v35 = vld [vmem:[%s2 + $0x30] sm:$0xff]
    %v36 = vld [vmem:[%s2 + $0x38] sm:$0xff]
    %v37 = vld [vmem:[%s2 + $0x40] sm:$0xff]
    %v38 = vld [vmem:[%s2 + $0x48] sm:$0xff]
    %v39 = vld [vmem:[%s2 + $0x50] sm:$0xff]
    %v40 = vld [vmem:[%s2 + $0x58] sm:$0xff]
    %v41 = vld [vmem:[%s2 + $0x60] sm:$0xff]
    %v42 = vld [vmem:[%s2 + $0x68] sm:$0xff]
    %v43 = vld [vmem:[%s2 + $0x70] sm:$0xff]
    %v44 = vld [vmem:[%s2 + $0x78] sm:$0xff]
    %45 = vmatprep.subr.mxu0 0.0
    %46 = vmatpush1.msra.mxu0 %v29
    %47 = vmatprep.subr.mxu0 0.0
    %48 = vmatpush1.msra.mxu0 %v30
    %49 = vmatprep.subr.mxu0 0.0
    %50 = vmatpush1.msra.mxu0 %v31
    %51 = vmatprep.subr.mxu0 0.0
    %52 = vmatpush1.msra.mxu0 %v32
    %53 = vmatprep.subr.mxu0 0.0
    %54 = vmatpush1.msra.mxu0 %v33
    %55 = vmatprep.subr.mxu0 0.0
    %56 = vmatpush1.msra.mxu0 %v34
    %57 = vmatprep.subr.mxu0 0.0
    %58 = vmatpush1.msra.mxu0 %v35
    %59 = vmatprep.subr.mxu0 0.0
    %60 = vmatpush1.msra.mxu0 %v36
    %61 = vmatprep.subr.mxu0 0.0
    %62 = vmatpush1.msra.mxu0 %v37
    %63 = vmatprep.subr.mxu0 0.0
    %64 = vmatpush1.msra.mxu0 %v38
    %65 = vmatprep.subr.mxu0 0.0
    %66 = vmatpush1.msra.mxu0 %v39
    %67 = vmatprep.subr.mxu0 0.0
    %68 = vmatpush1.msra.mxu0 %v40
    %69 = vmatprep.subr.mxu0 0.0
    %70 = vmatpush1.msra.mxu0 %v41
    %71 = vmatprep.subr.mxu0 0.0
    %72 = vmatpush1.msra.mxu0 %v42
    %73 = vmatprep.subr.mxu0 0.0
    %74 = vmatpush1.msra.mxu0 %v43
    %75 = vmatprep.subr.mxu0 0.0
    %76 = vmatpush1.msra.mxu0 %v44
    %77 = vmatprep.subr.mxu0 0.0
    %78 = vmatpush1.msra.mxu0 0.0
    %79 = vmatprep.subr.mxu0 0.0
    %80 = vmatpush1.msra.mxu0 0.0
    %81 = vmatprep.subr.mxu0 0.0
    %82 = vmatpush1.msra.mxu0 0.0
    %83 = vmatprep.subr.mxu0 0.0
    %84 = vmatpush1.msra.mxu0 0.0
    %85 = vmatprep.subr.mxu0 0.0
    %86 = vmatpush1.msra.mxu0 0.0
    %87 = vmatprep.subr.mxu0 0.0
    %88 = vmatpush1.msra.mxu0 0.0
    %89 = vmatprep.subr.mxu0 0.0
    %90 = vmatpush1.msra.mxu0 0.0
    %91 = vmatprep.subr.mxu0 0.0
    %92 = vmatpush1.msra.mxu0 0.0
    %93 = vmatprep.subr.mxu0 0.0
    %94 = vmatpush1.msra.mxu0 0.0
    %95 = vmatprep.subr.mxu0 0.0
    %96 = vmatpush1.msra.mxu0 0.0
    %97 = vmatprep.subr.mxu0 0.0
    %98 = vmatpush1.msra.mxu0 0.0
    %99 = vmatprep.subr.mxu0 0.0
    %100 = vmatpush1.msra.mxu0 0.0
    %101 = vmatprep.subr.mxu0 0.0
    %102 = vmatpush1.msra.mxu0 0.0
    %103 = vmatprep.subr.mxu0 0.0
    %104 = vmatpush1.msra.mxu0 0.0
    %105 = vmatprep.subr.mxu0 0.0
    %106 = vmatpush1.msra.mxu0 0.0
    %107 = vmatprep.subr.mxu0 0.0
    %108 = vmatpush1.msra.mxu0 0.0
    %109 = vmatprep.mubr.f32.mxu0 0.0
    %110 = vmatmul.mubr.f32.gmra.mrb[0].mxu0 %v27
    %v111 = vpop.f32.mrb[0].mxu0
    %v112 = vadd.f32 0.0, %v111
    %v113 = vpop.f32.mrb[0].mxu0
    %114 = vmatprep.mubr.f32.mxu0 0.0
    %115 = vmatmul.mubr.f32.gmra.mrb[0].mxu0 %v28
    %v116 = vpop.f32.mrb[0].mxu0
    %v117 = vadd.f32 0.0, %v116
    %v118 = vpop.f32.mrb[0].mxu0
    %119 = vdwg.mxu0
    %120 = vadd.xlane.f32.xlu0 %v27
    %v121 = vpop.xlane.xlu0 %120
    %122 = vadd.xlane.f32.xlu0 %v28
    %v123 = vpop.xlane.xlu0 %122
    %v124 = vrcp.pop 128.0
    %v125 = vmul.f32 %v121, %v124
    %v126 = vmul.f32 %v123, %v124
    %v127 = vsub.f32 %v27, %v125
    %v128 = vsub.f32 %v28, %v126
    %v129 = vmul.f32 %v127, %v127
    %v130 = vmul.f32 %v128, %v128
    %131 = vadd.xlane.f32.xlu0 %v129
    %v132 = vpop.xlane.xlu0 %131
    %133 = vadd.xlane.f32.xlu0 %v130
    %v134 = vpop.xlane.xlu0 %133
    %v135 = vmul.f32 %v132, %v124
    %v136 = vmul.f32 %v134, %v124
    %v137 = vadd.f32 %v135, 1e-05
    %v138 = vadd.f32 %v136, 1e-05
    %v139 = vrsqrt.pop %v137
    %v140 = vrsqrt.pop %v138
    %v141 = vmul.f32 %v139, %v112
    %v142 = vmul.f32 %v140, %v117
    %v143 = vmul.f32 %v139, %v125
    %v144 = vmul.f32 %v140, %v126
    %v145 = vld [vmem:[%s3] sm:$0x1]
    %v147 = vlaneseq
    %v148 = vshrl.u32 %v147, 7
    %v149 = vsub.s32 0, %v148
    %v150 = vrot.slane %v145, %v149
    %v152 = vmul.f32 %v143, %v150
    %v153 = vmul.f32 %v144, %v150
    %v154 = vsub.f32 %v141, %v152
    %v155 = vsub.f32 %v142, %v153
    %v156 = vld [vmem:[%s1] sm:$0xff]
    %v157 = vld [vmem:[%s1 + $0x8] sm:$0xff]
    %v158 = vadd.f32 %v154, %v156
    %v159 = vadd.f32 %v155, %v157
    %vm160 = vcmask 130048
    %v161 = vsel %vm160, %v158, -inf
    %162 = vmax.xlane.f32.xlu0 %v161
    %v163 = vpop.xlane.xlu0 %162
    %v164 = vsel %vm160, %v159, -inf
    %165 = vmax.xlane.f32.xlu0 %v164
    %v166 = vpop.xlane.xlu0 %165
    %v167 = vsub.f32 %v158, %v163
    %v168 = vsub.f32 %v159, %v166
    %v169 = vmul.f32 %v167, 1.442695
    %v170 = vpow.pop %v169
    %v171 = vmul.f32 %v168, 1.442695
    %v172 = vpow.pop %v171
    %v173 = vsel %vm160, %v170, 0.0
    %174 = vadd.xlane.f32.xlu0 %v173
    %v175 = vpop.xlane.xlu0 %174
    %v176 = vsel %vm160, %v172, 0.0
    %177 = vadd.xlane.f32.xlu0 %v176
    %v178 = vpop.xlane.xlu0 %177
    %v179 = vrcp.pop %v175
    %v180 = vrcp.pop %v178
    %v181 = vmul.f32 %v170, %v179
    %v182 = vmul.f32 %v172, %v180
    %v183 = vld [vmem:[%s4] sm:$0xff]
    %v184 = vld [vmem:[%s4 + $0x8] sm:$0xff]
    %v186 = vsel %vm160, %v181, 0
    %v189 = vsel %vm160, %v182, 0
    %191 = vmatprep.subr.mxu0 0.0
    %192 = vmatpush1.msra.mxu0 %v183
    %193 = vmatprep.subr.mxu0 0.0
    %194 = vmatpush1.msra.mxu0 %v184
    %195 = vmatprep.subr.mxu0 0.0
    %196 = vmatpush1.msra.mxu0 0.0
    %197 = vmatprep.subr.mxu0 0.0
    %198 = vmatpush1.msra.mxu0 0.0
    %199 = vmatprep.subr.mxu0 0.0
    %200 = vmatpush1.msra.mxu0 0.0
    %201 = vmatprep.subr.mxu0 0.0
    %202 = vmatpush1.msra.mxu0 0.0
    %203 = vmatprep.subr.mxu0 0.0
    %204 = vmatpush1.msra.mxu0 0.0
    %205 = vmatprep.subr.mxu0 0.0
    %206 = vmatpush1.msra.mxu0 0.0
    %207 = vmatprep.subr.mxu0 0.0
    %208 = vmatpush1.msra.mxu0 0.0
    %209 = vmatprep.subr.mxu0 0.0
    %210 = vmatpush1.msra.mxu0 0.0
    %211 = vmatprep.subr.mxu0 0.0
    %212 = vmatpush1.msra.mxu0 0.0
    %213 = vmatprep.subr.mxu0 0.0
    %214 = vmatpush1.msra.mxu0 0.0
    %215 = vmatprep.subr.mxu0 0.0
    %216 = vmatpush1.msra.mxu0 0.0
    %217 = vmatprep.subr.mxu0 0.0
    %218 = vmatpush1.msra.mxu0 0.0
    %219 = vmatprep.subr.mxu0 0.0
    %220 = vmatpush1.msra.mxu0 0.0
    %221 = vmatprep.subr.mxu0 0.0
    %222 = vmatpush1.msra.mxu0 0.0
    %223 = vmatprep.subr.mxu0 0.0
    %224 = vmatpush1.msra.mxu0 0.0
    %225 = vmatprep.subr.mxu0 0.0
    %226 = vmatpush1.msra.mxu0 0.0
    %227 = vmatprep.subr.mxu0 0.0
    %228 = vmatpush1.msra.mxu0 0.0
    %229 = vmatprep.subr.mxu0 0.0
    %230 = vmatpush1.msra.mxu0 0.0
    %231 = vmatprep.subr.mxu0 0.0
    %232 = vmatpush1.msra.mxu0 0.0
    %233 = vmatprep.subr.mxu0 0.0
    %234 = vmatpush1.msra.mxu0 0.0
    %235 = vmatprep.subr.mxu0 0.0
    %236 = vmatpush1.msra.mxu0 0.0
    %237 = vmatprep.subr.mxu0 0.0
    %238 = vmatpush1.msra.mxu0 0.0
    %239 = vmatprep.subr.mxu0 0.0
    %240 = vmatpush1.msra.mxu0 0.0
    %241 = vmatprep.subr.mxu0 0.0
    %242 = vmatpush1.msra.mxu0 0.0
    %243 = vmatprep.subr.mxu0 0.0
    %244 = vmatpush1.msra.mxu0 0.0
    %245 = vmatprep.subr.mxu0 0.0
    %246 = vmatpush1.msra.mxu0 0.0
    %247 = vmatprep.subr.mxu0 0.0
    %248 = vmatpush1.msra.mxu0 0.0
    %249 = vmatprep.subr.mxu0 0.0
    %250 = vmatpush1.msra.mxu0 0.0
    %251 = vmatprep.subr.mxu0 0.0
    %252 = vmatpush1.msra.mxu0 0.0
    %253 = vmatprep.subr.mxu0 0.0
    %254 = vmatpush1.msra.mxu0 0.0
    %255 = vmatprep.mubr.f32.mxu0 0.0
    %256 = vmatmul.mubr.f32.gmra.mrb[0].mxu0 %v186
    %v257 = vpop.f32.mrb[0].mxu0
    %v258 = vadd.f32 0.0, %v257
    %v259 = vpop.f32.mrb[0].mxu0
    %260 = vmatprep.mubr.f32.mxu0 0.0
    %261 = vmatmul.mubr.f32.gmra.mrb[0].mxu0 %v189
    %v262 = vpop.f32.mrb[0].mxu0
    %v263 = vadd.f32 0.0, %v262
    %v264 = vpop.f32.mrb[0].mxu0
    %265 = vdwg.mxu0
    %v266 = vmul.f32 %v258, %v27
    %v267 = vmul.f32 %v263, %v28
    %v268 = vld [vmem:[%s5] sm:$0xff]
    %v269 = vld [vmem:[%s5 + $0x8] sm:$0xff]
    %v270 = vld [vmem:[%s5 + $0x10] sm:$0xff]
    %v271 = vld [vmem:[%s5 + $0x18] sm:$0xff]
    %v272 = vld [vmem:[%s5 + $0x20] sm:$0xff]
    %v273 = vld [vmem:[%s5 + $0x28] sm:$0xff]
    %v274 = vld [vmem:[%s5 + $0x30] sm:$0xff]
    %v275 = vld [vmem:[%s5 + $0x38] sm:$0xff]
    %v276 = vld [vmem:[%s5 + $0x40] sm:$0xff]
    %v277 = vld [vmem:[%s5 + $0x48] sm:$0xff]
    %v278 = vld [vmem:[%s5 + $0x50] sm:$0xff]
    %v279 = vld [vmem:[%s5 + $0x58] sm:$0xff]
    %v280 = vld [vmem:[%s5 + $0x60] sm:$0xff]
    %v281 = vld [vmem:[%s5 + $0x68] sm:$0xff]
    %v282 = vld [vmem:[%s5 + $0x70] sm:$0xff]
    %v283 = vld [vmem:[%s5 + $0x78] sm:$0xff]
    %284 = vmatprep.subr.mxu0 0.0
    %285 = vmatpush1.msra.mxu0 %v268
    %286 = vmatprep.subr.mxu0 0.0
    %287 = vmatpush1.msra.mxu0 %v269
    %288 = vmatprep.subr.mxu0 0.0
    %289 = vmatpush1.msra.mxu0 %v270
    %290 = vmatprep.subr.mxu0 0.0
    %291 = vmatpush1.msra.mxu0 %v271
    %292 = vmatprep.subr.mxu0 0.0
    %293 = vmatpush1.msra.mxu0 %v272
    %294 = vmatprep.subr.mxu0 0.0
    %295 = vmatpush1.msra.mxu0 %v273
    %296 = vmatprep.subr.mxu0 0.0
    %297 = vmatpush1.msra.mxu0 %v274
    %298 = vmatprep.subr.mxu0 0.0
    %299 = vmatpush1.msra.mxu0 %v275
    %300 = vmatprep.subr.mxu0 0.0
    %301 = vmatpush1.msra.mxu0 %v276
    %302 = vmatprep.subr.mxu0 0.0
    %303 = vmatpush1.msra.mxu0 %v277
    %304 = vmatprep.subr.mxu0 0.0
    %305 = vmatpush1.msra.mxu0 %v278
    %306 = vmatprep.subr.mxu0 0.0
    %307 = vmatpush1.msra.mxu0 %v279
    %308 = vmatprep.subr.mxu0 0.0
    %309 = vmatpush1.msra.mxu0 %v280
    %310 = vmatprep.subr.mxu0 0.0
    %311 = vmatpush1.msra.mxu0 %v281
    %312 = vmatprep.subr.mxu0 0.0
    %313 = vmatpush1.msra.mxu0 %v282
    %314 = vmatprep.subr.mxu0 0.0
    %315 = vmatpush1.msra.mxu0 %v283
    %316 = vmatprep.subr.mxu0 0.0
    %317 = vmatpush1.msra.mxu0 0.0
    %318 = vmatprep.subr.mxu0 0.0
    %319 = vmatpush1.msra.mxu0 0.0
    %320 = vmatprep.subr.mxu0 0.0
    %321 = vmatpush1.msra.mxu0 0.0
    %322 = vmatprep.subr.mxu0 0.0
    %323 = vmatpush1.msra.mxu0 0.0
    %324 = vmatprep.subr.mxu0 0.0
    %325 = vmatpush1.msra.mxu0 0.0
    %326 = vmatprep.subr.mxu0 0.0
    %327 = vmatpush1.msra.mxu0 0.0
    %328 = vmatprep.subr.mxu0 0.0
    %329 = vmatpush1.msra.mxu0 0.0
    %330 = vmatprep.subr.mxu0 0.0
    %331 = vmatpush1.msra.mxu0 0.0
    %332 = vmatprep.subr.mxu0 0.0
    %333 = vmatpush1.msra.mxu0 0.0
    %334 = vmatprep.subr.mxu0 0.0
    %335 = vmatpush1.msra.mxu0 0.0
    %336 = vmatprep.subr.mxu0 0.0
    %337 = vmatpush1.msra.mxu0 0.0
    %338 = vmatprep.subr.mxu0 0.0
    %339 = vmatpush1.msra.mxu0 0.0
    %340 = vmatprep.subr.mxu0 0.0
    %341 = vmatpush1.msra.mxu0 0.0
    %342 = vmatprep.subr.mxu0 0.0
    %343 = vmatpush1.msra.mxu0 0.0
    %344 = vmatprep.subr.mxu0 0.0
    %345 = vmatpush1.msra.mxu0 0.0
    %346 = vmatprep.subr.mxu0 0.0
    %347 = vmatpush1.msra.mxu0 0.0
    %348 = vmatprep.mubr.f32.mxu0 0.0
    %349 = vmatmul.mubr.f32.gmra.mrb[0].mxu0 %v266
    %v350 = vpop.f32.mrb[0].mxu0
    %v351 = vadd.f32 0.0, %v350
    %v352 = vpop.f32.mrb[0].mxu0
    %353 = vmatprep.mubr.f32.mxu0 0.0
    %354 = vmatmul.mubr.f32.gmra.mrb[0].mxu0 %v267
    %v355 = vpop.f32.mrb[0].mxu0
    %v356 = vadd.f32 0.0, %v355
    %v357 = vpop.f32.mrb[0].mxu0
    %358 = vdwg.mxu0
    %vm359 = vcmask 64512
    %v360 = vsel %vm359, %v351, 0.0
    %361 = vadd.xlane.f32.xlu0 %v360
    %v362 = vpop.xlane.xlu0 %361
    %v363 = vsel %vm359, %v356, 0.0
    %364 = vadd.xlane.f32.xlu0 %v363
    %v365 = vpop.xlane.xlu0 %364
    %v366 = vrcp.pop 8.0
    %v367 = vmul.f32 %v362, %v366
    %v368 = vmul.f32 %v365, %v366
    %v369 = vsub.f32 %v351, %v367
    %v370 = vsub.f32 %v356, %v368
    %v371 = vmul.f32 %v369, %v369
    %v372 = vmul.f32 %v370, %v370
    %v373 = vsel %vm359, %v371, 0.0
    %374 = vadd.xlane.f32.xlu0 %v373
    %v375 = vpop.xlane.xlu0 %374
    %v376 = vsel %vm359, %v372, 0.0
    %377 = vadd.xlane.f32.xlu0 %v376
    %v378 = vpop.xlane.xlu0 %377
    %v379 = vmul.f32 %v375, %v366
    %v380 = vmul.f32 %v378, %v366
    %v381 = vadd.f32 %v379, 1e-05
    %v382 = vadd.f32 %v380, 1e-05
    %v383 = vrsqrt.pop %v381
    %v384 = vrsqrt.pop %v382
    %v385 = vmul.f32 %v369, %v383
    %v386 = vmul.f32 %v370, %v384
    %v387 = vld [vmem:[%s6] sm:$0xff]
    %v388 = vld [vmem:[%s6 + $0x8] sm:$0x1]
    %v389 = vlaneseq
    %v390 = vshrl.u32 %v389, 7
    %v391 = vsub.s32 0, %v390
    %v392 = vrot.slane %v388, %v391
    %v394 = vsel %vm359, %v385, 0
    %v397 = vsel %vm359, %v386, 0
    %399 = vmatprep.subr.mxu0 0.0
    %400 = vmatpush1.msra.mxu0 %v387
    %401 = vmatprep.subr.mxu0 0.0
    %402 = vmatpush1.msra.mxu0 0.0
    %403 = vmatprep.subr.mxu0 0.0
    %404 = vmatpush1.msra.mxu0 0.0
    %405 = vmatprep.subr.mxu0 0.0
    %406 = vmatpush1.msra.mxu0 0.0
    %407 = vmatprep.subr.mxu0 0.0
    %408 = vmatpush1.msra.mxu0 0.0
    %409 = vmatprep.subr.mxu0 0.0
    %410 = vmatpush1.msra.mxu0 0.0
    %411 = vmatprep.subr.mxu0 0.0
    %412 = vmatpush1.msra.mxu0 0.0
    %413 = vmatprep.subr.mxu0 0.0
    %414 = vmatpush1.msra.mxu0 0.0
    %415 = vmatprep.subr.mxu0 0.0
    %416 = vmatpush1.msra.mxu0 0.0
    %417 = vmatprep.subr.mxu0 0.0
    %418 = vmatpush1.msra.mxu0 0.0
    %419 = vmatprep.subr.mxu0 0.0
    %420 = vmatpush1.msra.mxu0 0.0
    %421 = vmatprep.subr.mxu0 0.0
    %422 = vmatpush1.msra.mxu0 0.0
    %423 = vmatprep.subr.mxu0 0.0
    %424 = vmatpush1.msra.mxu0 0.0
    %425 = vmatprep.subr.mxu0 0.0
    %426 = vmatpush1.msra.mxu0 0.0
    %427 = vmatprep.subr.mxu0 0.0
    %428 = vmatpush1.msra.mxu0 0.0
    %429 = vmatprep.subr.mxu0 0.0
    %430 = vmatpush1.msra.mxu0 0.0
    %431 = vmatprep.subr.mxu0 0.0
    %432 = vmatpush1.msra.mxu0 0.0
    %433 = vmatprep.subr.mxu0 0.0
    %434 = vmatpush1.msra.mxu0 0.0
    %435 = vmatprep.subr.mxu0 0.0
    %436 = vmatpush1.msra.mxu0 0.0
    %437 = vmatprep.subr.mxu0 0.0
    %438 = vmatpush1.msra.mxu0 0.0
    %439 = vmatprep.subr.mxu0 0.0
    %440 = vmatpush1.msra.mxu0 0.0
    %441 = vmatprep.subr.mxu0 0.0
    %442 = vmatpush1.msra.mxu0 0.0
    %443 = vmatprep.subr.mxu0 0.0
    %444 = vmatpush1.msra.mxu0 0.0
    %445 = vmatprep.subr.mxu0 0.0
    %446 = vmatpush1.msra.mxu0 0.0
    %447 = vmatprep.subr.mxu0 0.0
    %448 = vmatpush1.msra.mxu0 0.0
    %449 = vmatprep.subr.mxu0 0.0
    %450 = vmatpush1.msra.mxu0 0.0
    %451 = vmatprep.subr.mxu0 0.0
    %452 = vmatpush1.msra.mxu0 0.0
    %453 = vmatprep.subr.mxu0 0.0
    %454 = vmatpush1.msra.mxu0 0.0
    %455 = vmatprep.subr.mxu0 0.0
    %456 = vmatpush1.msra.mxu0 0.0
    %457 = vmatprep.subr.mxu0 0.0
    %458 = vmatpush1.msra.mxu0 0.0
    %459 = vmatprep.subr.mxu0 0.0
    %460 = vmatpush1.msra.mxu0 0.0
    %461 = vmatprep.subr.mxu0 0.0
    %462 = vmatpush1.msra.mxu0 0.0
    %463 = vmatprep.mubr.f32.mxu0 0.0
    %464 = vmatmul.mubr.f32.gmra.mrb[0].mxu0 %v394
    %v465 = vpop.f32.mrb[0].mxu0
    %v466 = vadd.f32 %v392, %v465
    %v467 = vpop.f32.mrb[0].mxu0
    %468 = vmatprep.mubr.f32.mxu0 0.0
    %469 = vmatmul.mubr.f32.gmra.mrb[0].mxu0 %v397
    %v470 = vpop.f32.mrb[0].mxu0
    %v471 = vadd.f32 %v392, %v470
    %v472 = vpop.f32.mrb[0].mxu0
    %473 = vdwg.mxu0
    %474 = vst [vmem:[#allocation2] sm:$0xff] %v466
    %475 = vst [vmem:[#allocation2 + $0x8] sm:$0xff] %v471
    // Predicated region
    $region30: #{tpu_custom_call.1} parent=1 // pred_check
      _
    $region31: #{tpu_custom_call.1} parent=1 // pred_check_branch
      %477 = sbr.rel (0) target = $region33
    $region32: #{tpu_custom_call.1} parent=1 // pred_region
      %s479 = ssub.s32 256, 256
      %480 = vsyncadd [#allocation3], %s479
      %s481 = sshll.u32 [#allocation2], 4
      %s482 = int_to_ptr.vmem [resolvable:$true] %s481
      %487 = dma.vmem_to_hbm [thread:$0]  %s482, 256, %s7, [#allocation3], 128, 128, 8
    $region33: #{tpu_custom_call.1} parent=1 // pred_fallthru
      _
    // Predicated region
    $region34: #{tpu_custom_call.1} parent=1 // pred_check
      _
    $region35: #{tpu_custom_call.1} parent=1 // pred_check_branch
      %489 = sbr.rel (0) target = $region37
    $region36: #{tpu_custom_call.1} parent=1 // pred_region
      %490 = dma.done [#allocation3], 256
    $region37: #{tpu_custom_call.1} parent=1 // pred_fallthru
      _
    %491 = vsyncpa [#allocation3], 1

</llo_original>
